<compile_context>
chip_gen: v7x
topology: tpu7x:2x2x1
jax: 0.10.0
libtpu: 0.0.40
codegen_flags: <defaults>
</compile_context>

<pallas_src>
import functools

import jax
import jax.numpy as jnp
from jax.experimental import pallas as pl
from jax.experimental.pallas import tpu as pltpu


def _round_up(x, m):
    return ((x + m - 1) // m) * m


def _cdiv(a, b):
    return -(-a // b)


def _res_net_kernel(x_ref, w1_ref, w2_ref, wlin_ref, w3_ref,
                    b1_ref, b2_ref, bout_ref, o_ref, *, nl_dtype):
    x = x_ref[...]                                   # (tb, n_in) f32
    xm = x.astype(nl_dtype)

    # Nonlinear path: bias adds + tanh in nl_dtype (bf16 on v6e/v7x);
    # MXU accumulation stays f32 via preferred_element_type.
    h1 = jnp.tanh(
        jnp.dot(xm, w1_ref[...],
                preferred_element_type=jnp.float32).astype(nl_dtype)
        + b1_ref[...])
    h2 = jnp.tanh(
        jnp.dot(h1, w2_ref[...],
                preferred_element_type=jnp.float32).astype(nl_dtype)
        + b2_ref[...])

    # Skip path kept in f32 (exact identity at init) + final layer + fused bias.
    y = (jnp.dot(x, wlin_ref[...], preferred_element_type=jnp.float32)
         + jnp.dot(h2, w3_ref[...], preferred_element_type=jnp.float32)
         + bout_ref[...])
    o_ref[...] = y.astype(o_ref.dtype)


def prepare_params(params, use_bf16=True):
    """One-time packing of params (weights already (in, out); biases 1-D).

    Do this ONCE outside the forward; it removes ~7 tiny XLA ops per call.
    Set use_bf16=False on v5e (no bf16 VPU/EUP) or when full f32 is required.
    """
    nl_dtype = jnp.bfloat16 if use_bf16 else jnp.float32
    H = params["w1"].shape[1]
    n_out = params["w_lin"].shape[1]
    return {
        "w1": jnp.asarray(params["w1"], nl_dtype),
        "w2": jnp.asarray(params["w2"], nl_dtype),
        "w3": jnp.asarray(params["w3"], nl_dtype),
        "w_lin": jnp.asarray(params["w_lin"], jnp.float32),   # skip path stays f32
        "b1": jnp.asarray(params["b1"], nl_dtype).reshape(1, H),
        "b2": jnp.asarray(params["b2"], nl_dtype).reshape(1, H),
        "b_out": (jnp.asarray(params["b_lin"], jnp.float32)
                  + jnp.asarray(params["b3"], jnp.float32)).reshape(1, n_out),
    }


@functools.partial(jax.jit, static_argnames=("tb",))
def identity_init_simple_res_net_fwd(x, prepared, *, tb=None):
    """x: (B, n_in) f32. prepared: output of prepare_params()."""
    B, n_in = x.shape
    H = prepared["w1"].shape[1]
    n_out = prepared["w_lin"].shape[1]

    # Batch tiling: single grid step for small batches; for large batches an
    # even number (>=2, for v7x's 2 TensorCores) of <=2048-row tiles.
    if tb is None:
        if B <= 512:
            tb = _round_up(B, 8)
        else:
            n_tiles = max(2, _cdiv(B, 2048))
            if n_tiles % 2:
                n_tiles += 1
            tb = _round_up(_cdiv(B, n_tiles), 8)
    else:
        tb = _round_up(max(tb, 8), 8)

    B_pad = _round_up(B, tb)
    x_p = x if B_pad == B else jnp.pad(x, ((0, B_pad - B), (0, 0)))
    grid = (B_pad // tb,)

    def x_map(i):
        return (i, 0)

    def c_map(i):
        return (0, 0)

    grid_spec = pltpu.PrefetchScalarGridSpec(
        num_scalar_prefetch=0,
        grid=grid,
        in_specs=[
            pl.BlockSpec((tb, n_in), x_map),        # x tile (f32)
            pl.BlockSpec((n_in, H), c_map),         # w1
            pl.BlockSpec((H, H), c_map),            # w2
            pl.BlockSpec((n_in, n_out), c_map),     # w_lin (f32 skip path)
            pl.BlockSpec((H, n_out), c_map),        # w3
            pl.BlockSpec((1, H), c_map),            # b1
            pl.BlockSpec((1, H), c_map),            # b2
            pl.BlockSpec((1, n_out), c_map),        # b_lin + b3 (folded)
        ],
        out_specs=pl.BlockSpec((tb, n_out), x_map), # true width -> small writeback
    )

    out = pl.pallas_call(
        functools.partial(_res_net_kernel, nl_dtype=prepared["w1"].dtype),
        out_shape=jax.ShapeDtypeStruct((B_pad, n_out), jnp.float32),
        grid_spec=grid_spec,
        compiler_params=pltpu.CompilerParams(
            dimension_semantics=("parallel",)),
    )(x_p, prepared["w1"], prepared["w2"], prepared["w_lin"], prepared["w3"],
      prepared["b1"], prepared["b2"], prepared["b_out"])

    return out if B_pad == B else out[:B]


# ------------------------- parameter construction ---------------------------

def make_params(key, n_in=6, n_out=5, n_nodes=64):
    """Parameters mirroring the PyTorch __init__ (identity skip, zeroed final layer)."""
    k1, k2 = jax.random.split(key, 2)

    w_lin = jnp.eye(n_out, n_in, dtype=jnp.float32)             # torch (out, in)

    bound1 = 1.0 / jnp.sqrt(jnp.float32(n_in))
    bound2 = 1.0 / jnp.sqrt(jnp.float32(n_nodes))
    w1 = jax.random.uniform(k1, (n_nodes, n_in), jnp.float32, -bound1, bound1)
    w2 = jax.random.uniform(k2, (n_nodes, n_nodes), jnp.float32, -bound2, bound2)
    w3 = jnp.zeros((n_out, n_nodes), dtype=jnp.float32)

    return {
        "w_lin": w_lin.T, "b_lin": jnp.zeros((n_out,), jnp.float32),
        "w1": w1.T, "b1": jnp.zeros((n_nodes,), jnp.float32),
        "w2": w2.T, "b2": jnp.zeros((n_nodes,), jnp.float32),
        "w3": w3.T, "b3": jnp.zeros((n_out,), jnp.float32),
    }


def make_random_params(key, n_in=6, n_out=5, n_nodes=64):
    """Fully randomized parameters (to test the kernel beyond the identity init)."""
    ks = jax.random.split(key, 8)
    u = lambda k, shape: jax.random.uniform(k, shape, jnp.float32, -0.3, 0.3)
    return {
        "w_lin": u(ks[0], (n_in, n_out)), "b_lin": u(ks[1], (n_out,)),
        "w1": u(ks[2], (n_in, n_nodes)), "b1": u(ks[3], (n_nodes,)),
        "w2": u(ks[4], (n_nodes, n_nodes)), "b2": u(ks[5], (n_nodes,)),
        "w3": u(ks[6], (n_nodes, n_out)), "b3": u(ks[7], (n_out,)),
    }


def reference_fwd(x, p):
    y_lin = x @ p["w_lin"] + p["b_lin"]
    h = jnp.tanh(x @ p["w1"] + p["b1"])
    h = jnp.tanh(h @ p["w2"] + p["b2"])
    return y_lin + (h @ p["w3"] + p["b3"])


if __name__ == "__main__":
    n_in, n_out, n_nodes = 6, 5, 64
    B = 16

    key = jax.random.PRNGKey(0)
    kx, kp = jax.random.split(key)
    x = jax.random.normal(kx, (B, n_in), dtype=jnp.float32)

    # (a) exact PyTorch init, default bf16 nonlinear path: identity is exact
    #     because the skip path is f32 and the final weight is exactly zero.
    params = make_params(kp, n_in=n_in, n_out=n_out, n_nodes=n_nodes)
    prep_bf16 = prepare_params(params, use_bf16=True)
    out = jax.block_until_ready(identity_init_simple_res_net_fwd(x, prep_bf16))
    assert out.shape == (B, n_out)
    assert jnp.allclose(out, x[:, :n_out], atol=1e-5, rtol=1e-5), "identity property violated"
    assert jnp.allclose(out, reference_fwd(x, params), atol=1e-5, rtol=1e-5), \
        "mismatch vs reference (init params)"

    # (b) randomized parameters, f32 path: tight comparison vs reference.
    params_r = make_random_params(kp, n_in=n_in, n_out=n_out, n_nodes=n_nodes)
    prep_f32 = prepare_params(params_r, use_bf16=False)
    out_r = jax.block_until_ready(identity_init_simple_res_net_fwd(x, prep_f32))
    assert jnp.allclose(out_r, reference_fwd(x, params_r), atol=1e-5, rtol=1e-5), \
        "mismatch vs reference (random params, f32)"

    # (c) randomized parameters, bf16 nonlinear path: loose-tolerance smoke test.
    prep_rb = prepare_params(params_r, use_bf16=True)
    out_rb = jax.block_until_ready(identity_init_simple_res_net_fwd(x, prep_rb))
    assert jnp.allclose(out_rb, reference_fwd(x, params_r), atol=5e-2, rtol=5e-2), \
        "mismatch vs reference (random params, bf16)"

    # (d) multi-tile grid + ragged batch (exercises padding / row-slice path).
    B2 = 600
    x2 = jax.random.normal(kx, (B2, n_in), dtype=jnp.float32)
    out2 = jax.block_until_ready(
        identity_init_simple_res_net_fwd(x2, prep_f32, tb=256))
    assert out2.shape == (B2, n_out)
    assert jnp.allclose(out2, reference_fwd(x2, params_r), atol=1e-5, rtol=1e-5), \
        "mismatch vs reference (multi-tile ragged batch)"

    print("KERNEL_OK")
</pallas_src>

<mosaic_0001>
module attributes {stable_mosaic.version = 11 : i64} {
  func.func @_res_net_kernel(%arg0: i32, %arg1: memref<16x6xf32, #tpu.memory_space<vmem>>, %arg2: memref<6x64xbf16, #tpu.memory_space<vmem>>, %arg3: memref<64x64xbf16, #tpu.memory_space<vmem>>, %arg4: memref<6x5xf32, #tpu.memory_space<vmem>>, %arg5: memref<64x5xbf16, #tpu.memory_space<vmem>>, %arg6: memref<1x64xbf16, #tpu.memory_space<vmem>>, %arg7: memref<1x64xbf16, #tpu.memory_space<vmem>>, %arg8: memref<1x5xf32, #tpu.memory_space<vmem>>, %arg9: memref<16x5xf32, #tpu.memory_space<vmem>>) attributes {dimension_semantics = [#tpu.dimension_semantics<parallel>], iteration_bounds = array<i64: 1>, scalar_prefetch = 0 : i64, scratch_operands = 0 : i64, tpu.core_type = #tpu.core_type<tc>, window_params = [{transform_indices = @transform_0, window_bounds = array<i64: 16, 6>}, {pipeline_mode = #tpu.pipeline_mode<synchronous>, transform_indices = @transform_1, window_bounds = array<i64: 6, 64>}, {pipeline_mode = #tpu.pipeline_mode<synchronous>, transform_indices = @transform_2, window_bounds = array<i64: 64, 64>}, {pipeline_mode = #tpu.pipeline_mode<synchronous>, transform_indices = @transform_3, window_bounds = array<i64: 6, 5>}, {pipeline_mode = #tpu.pipeline_mode<synchronous>, transform_indices = @transform_4, window_bounds = array<i64: 64, 5>}, {pipeline_mode = #tpu.pipeline_mode<synchronous>, transform_indices = @transform_5, window_bounds = array<i64: 1, 64>}, {pipeline_mode = #tpu.pipeline_mode<synchronous>, transform_indices = @transform_6, window_bounds = array<i64: 1, 64>}, {pipeline_mode = #tpu.pipeline_mode<synchronous>, transform_indices = @transform_7, window_bounds = array<i64: 1, 5>}, {transform_indices = @transform_8, window_bounds = array<i64: 16, 5>}]} {
    %c0 = arith.constant 0 : index
    %c0_0 = arith.constant 0 : index
    %0 = vector.load %arg1[%c0, %c0_0] : memref<16x6xf32, #tpu.memory_space<vmem>>, vector<16x6xf32>
    %1 = arith.truncf %0 : vector<16x6xf32> to vector<16x6xbf16>
    %c0_1 = arith.constant 0 : index
    %c0_2 = arith.constant 0 : index
    %2 = vector.load %arg2[%c0_1, %c0_2] : memref<6x64xbf16, #tpu.memory_space<vmem>>, vector<6x64xbf16>
    %cst = arith.constant dense<0.000000e+00> : vector<16x64xf32>
    %3 = tpu.matmul %1, %2, %cst {dimension_numbers = #tpu.dot_dimension_numbers<[1], [0], [0], [1], [0, 0, 1, 1], [], []>} : vector<16x6xbf16>, vector<6x64xbf16>, vector<16x64xf32> -> vector<16x64xf32>
    %4 = arith.truncf %3 : vector<16x64xf32> to vector<16x64xbf16>
    %c0_3 = arith.constant 0 : index
    %c0_4 = arith.constant 0 : index
    %5 = vector.load %arg6[%c0_3, %c0_4] : memref<1x64xbf16, #tpu.memory_space<vmem>>, vector<1x64xbf16>
    %6 = vector.broadcast %5 : vector<1x64xbf16> to vector<16x64xbf16>
    %7 = arith.addf %4, %6 : vector<16x64xbf16>
    %8 = math.tanh %7 : vector<16x64xbf16>
    %c0_5 = arith.constant 0 : index
    %c0_6 = arith.constant 0 : index
    %9 = vector.load %arg3[%c0_5, %c0_6] : memref<64x64xbf16, #tpu.memory_space<vmem>>, vector<64x64xbf16>
    %cst_7 = arith.constant dense<0.000000e+00> : vector<16x64xf32>
    %10 = tpu.matmul %8, %9, %cst_7 {dimension_numbers = #tpu.dot_dimension_numbers<[1], [0], [0], [1], [0, 0, 1, 1], [], []>} : vector<16x64xbf16>, vector<64x64xbf16>, vector<16x64xf32> -> vector<16x64xf32>
    %11 = arith.truncf %10 : vector<16x64xf32> to vector<16x64xbf16>
    %c0_8 = arith.constant 0 : index
    %c0_9 = arith.constant 0 : index
    %12 = vector.load %arg7[%c0_8, %c0_9] : memref<1x64xbf16, #tpu.memory_space<vmem>>, vector<1x64xbf16>
    %13 = vector.broadcast %12 : vector<1x64xbf16> to vector<16x64xbf16>
    %14 = arith.addf %11, %13 : vector<16x64xbf16>
    %15 = math.tanh %14 : vector<16x64xbf16>
    %c0_10 = arith.constant 0 : index
    %c0_11 = arith.constant 0 : index
    %16 = vector.load %arg4[%c0_10, %c0_11] : memref<6x5xf32, #tpu.memory_space<vmem>>, vector<6x5xf32>
    %cst_12 = arith.constant dense<0.000000e+00> : vector<16x5xf32>
    %17 = tpu.matmul %0, %16, %cst_12 {dimension_numbers = #tpu.dot_dimension_numbers<[1], [0], [0], [1], [0, 0, 1, 1], [], []>} : vector<16x6xf32>, vector<6x5xf32>, vector<16x5xf32> -> vector<16x5xf32>
    %c0_13 = arith.constant 0 : index
    %c0_14 = arith.constant 0 : index
    %18 = vector.load %arg5[%c0_13, %c0_14] : memref<64x5xbf16, #tpu.memory_space<vmem>>, vector<64x5xbf16>
    %cst_15 = arith.constant dense<0.000000e+00> : vector<16x5xf32>
    %19 = tpu.matmul %15, %18, %cst_15 {dimension_numbers = #tpu.dot_dimension_numbers<[1], [0], [0], [1], [0, 0, 1, 1], [], []>} : vector<16x64xbf16>, vector<64x5xbf16>, vector<16x5xf32> -> vector<16x5xf32>
    %20 = arith.addf %17, %19 : vector<16x5xf32>
    %c0_16 = arith.constant 0 : index
    %c0_17 = arith.constant 0 : index
    %21 = vector.load %arg8[%c0_16, %c0_17] : memref<1x5xf32, #tpu.memory_space<vmem>>, vector<1x5xf32>
    %22 = vector.broadcast %21 : vector<1x5xf32> to vector<16x5xf32>
    %23 = arith.addf %20, %22 : vector<16x5xf32>
    %c0_18 = arith.constant 0 : index
    %c0_19 = arith.constant 0 : index
    %24 = vector.load %arg9[%c0_18, %c0_19] : memref<16x5xf32, #tpu.memory_space<vmem>>, vector<16x5xf32>
    tpu.vector_store %arg9[%c0_18, %c0_19], %23 {strides = array<i32>} : memref<16x5xf32, #tpu.memory_space<vmem>>, vector<16x5xf32>,
    return
  }
  func.func @transform_0(%arg0: i32) -> (i32, i32) {
    %c0_i32 = arith.constant 0 : i32
    %c0_i32_0 = arith.constant 0 : i32
    return %arg0, %c0_i32 : i32, i32
  }
  func.func @transform_1(%arg0: i32) -> (i32, i32) {
    %c0_i32 = arith.constant 0 : i32
    %c0_i32_0 = arith.constant 0 : i32
    %c0_i32_1 = arith.constant 0 : i32
    return %c0_i32, %c0_i32_0 : i32, i32
  }
  func.func @transform_2(%arg0: i32) -> (i32, i32) {
    %c0_i32 = arith.constant 0 : i32
    %c0_i32_0 = arith.constant 0 : i32
    %c0_i32_1 = arith.constant 0 : i32
    return %c0_i32, %c0_i32_0 : i32, i32
  }
  func.func @transform_3(%arg0: i32) -> (i32, i32) {
    %c0_i32 = arith.constant 0 : i32
    %c0_i32_0 = arith.constant 0 : i32
    %c0_i32_1 = arith.constant 0 : i32
    return %c0_i32, %c0_i32_0 : i32, i32
  }
  func.func @transform_4(%arg0: i32) -> (i32, i32) {
    %c0_i32 = arith.constant 0 : i32
    %c0_i32_0 = arith.constant 0 : i32
    %c0_i32_1 = arith.constant 0 : i32
    return %c0_i32, %c0_i32_0 : i32, i32
  }
  func.func @transform_5(%arg0: i32) -> (i32, i32) {
    %c0_i32 = arith.constant 0 : i32
    %c0_i32_0 = arith.constant 0 : i32
    %c0_i32_1 = arith.constant 0 : i32
    return %c0_i32, %c0_i32_0 : i32, i32
  }
  func.func @transform_6(%arg0: i32) -> (i32, i32) {
    %c0_i32 = arith.constant 0 : i32
    %c0_i32_0 = arith.constant 0 : i32
    %c0_i32_1 = arith.constant 0 : i32
    return %c0_i32, %c0_i32_0 : i32, i32
  }
  func.func @transform_7(%arg0: i32) -> (i32, i32) {
    %c0_i32 = arith.constant 0 : i32
    %c0_i32_0 = arith.constant 0 : i32
    %c0_i32_1 = arith.constant 0 : i32
    return %c0_i32, %c0_i32_0 : i32, i32
  }
  func.func @transform_8(%arg0: i32) -> (i32, i32) {
    %c0_i32 = arith.constant 0 : i32
    %c0_i32_0 = arith.constant 0 : i32
    return %arg0, %c0_i32 : i32, i32
  }
}

</mosaic_0001>

<llo_original>
// kernel: identity_init_simple_res_net_fwd.1
$region0: #{identity_init_simple_res_net_fwd.1}
  #allocation0 [shape = 'u32[]', space=smem, size = 0x4, offset = 0x4, fixed_abs, tag = 'smem constant byte address 0x4 - core index']
  #allocation1 [shape = 'u32[144,128]{1,0:T(1,128)}', space=vmem, size = 0x12000, scoped, tag = 'internal scratch']
  %s0 = inlined_call_operand.vmem [shape: f32[16,6], index: 0, kind: input, shape index: {}]
  %s1 = inlined_call_operand.vmem [shape: bf16[6,64], index: 1, kind: input, shape index: {}]
  %s2 = inlined_call_operand.vmem [shape: bf16[64,64], index: 2, kind: input, shape index: {}]
  %s3 = inlined_call_operand.vmem [shape: f32[6,5], index: 3, kind: input, shape index: {}]
  %s4 = inlined_call_operand.vmem [shape: bf16[64,5], index: 4, kind: input, shape index: {}]
  %s5 = inlined_call_operand.vmem [shape: bf16[1,64], index: 5, kind: input, shape index: {}]
  %s6 = inlined_call_operand.vmem [shape: bf16[1,64], index: 6, kind: input, shape index: {}]
  %s7 = inlined_call_operand.vmem [shape: f32[1,5], index: 7, kind: input, shape index: {}]
  %s8 = inlined_call_operand.vmem [shape: f32[16,5], index: 8, kind: output, shape index: {}]
  %s9 = sld [smem:[#allocation0]]
  $region42: #{identity_init_simple_res_net_fwd.1} parent=0
    _
  %s11 = ssub.s32 1, %s9
  %s12 = scalar_select 0, %s11, %s9
  // Predicated region
  $region2: #{identity_init_simple_res_net_fwd.1} parent=0 // pred_check
    _
  $region3: #{identity_init_simple_res_net_fwd.1} parent=0 // pred_check_branch
    %14 = sbr.rel (0) target = $region5
  $region4: #{identity_init_simple_res_net_fwd.1} parent=0 // pred_region
    _
  $region5: #{identity_init_simple_res_net_fwd.1} parent=0 // pred_fallthru
    _
  // Predicated region
  $region6: #{identity_init_simple_res_net_fwd.1} parent=0 // pred_check
    _
  $region7: #{identity_init_simple_res_net_fwd.1} parent=0 // pred_check_branch
    %16 = sbr.rel (0) target = $region9
  $region8: #{identity_init_simple_res_net_fwd.1} parent=0 // pred_region
    _
  $region9: #{identity_init_simple_res_net_fwd.1} parent=0 // pred_fallthru
    _
  // Predicated region
  $region10: #{identity_init_simple_res_net_fwd.1} parent=0 // pred_check
    _
  $region11: #{identity_init_simple_res_net_fwd.1} parent=0 // pred_check_branch
    %18 = sbr.rel (0) target = $region13
  $region12: #{identity_init_simple_res_net_fwd.1} parent=0 // pred_region
    _
  $region13: #{identity_init_simple_res_net_fwd.1} parent=0 // pred_fallthru
    _
  // Predicated region
  $region14: #{identity_init_simple_res_net_fwd.1} parent=0 // pred_check
    _
  $region15: #{identity_init_simple_res_net_fwd.1} parent=0 // pred_check_branch
    %20 = sbr.rel (0) target = $region17
  $region16: #{identity_init_simple_res_net_fwd.1} parent=0 // pred_region
    _
  $region17: #{identity_init_simple_res_net_fwd.1} parent=0 // pred_fallthru
    _
  // Predicated region
  $region18: #{identity_init_simple_res_net_fwd.1} parent=0 // pred_check
    _
  $region19: #{identity_init_simple_res_net_fwd.1} parent=0 // pred_check_branch
    %22 = sbr.rel (0) target = $region21
  $region20: #{identity_init_simple_res_net_fwd.1} parent=0 // pred_region
    _
  $region21: #{identity_init_simple_res_net_fwd.1} parent=0 // pred_fallthru
    _
  // Predicated region
  $region22: #{identity_init_simple_res_net_fwd.1} parent=0 // pred_check
    _
  $region23: #{identity_init_simple_res_net_fwd.1} parent=0 // pred_check_branch
    %24 = sbr.rel (0) target = $region25
  $region24: #{identity_init_simple_res_net_fwd.1} parent=0 // pred_region
    _
  $region25: #{identity_init_simple_res_net_fwd.1} parent=0 // pred_fallthru
    _
  // Predicated region
  $region26: #{identity_init_simple_res_net_fwd.1} parent=0 // pred_check
    _
  $region27: #{identity_init_simple_res_net_fwd.1} parent=0 // pred_check_branch
    %26 = sbr.rel (0) target = $region29
  $region28: #{identity_init_simple_res_net_fwd.1} parent=0 // pred_region
    _
  $region29: #{identity_init_simple_res_net_fwd.1} parent=0 // pred_fallthru
    _
  // Predicated region
  $region30: #{identity_init_simple_res_net_fwd.1} parent=0 // pred_check
    _
  $region31: #{identity_init_simple_res_net_fwd.1} parent=0 // pred_check_branch
    %28 = sbr.rel (0) target = $region33
  $region32: #{identity_init_simple_res_net_fwd.1} parent=0 // pred_region
    _
  $region33: #{identity_init_simple_res_net_fwd.1} parent=0 // pred_fallthru
    _
  %v30 = vld [vmem:[%s0] sm:$0xff]
  %v31 = vld [vmem:[%s0 + $0x8] sm:$0xff]
  %v32 = vpack.c.bf16 %v31, %v30
  %v33 = vld [vmem:[%s1] sm:$0x7]
  %vm34 = vcmask 48128
  %v36 = vsel %vm34, %v32, 0
  %vm38 = vcmask 1042432
  %v40 = vsel %vm38, %v33, 0
  %42 = vmatprep.subr.bf16.mxu0 0
  %43 = vmatpush1.bf16.msra.mxu0 %v40
  %44 = vmatprep.subr.bf16.mxu0 0
  %45 = vmatpush1.bf16.msra.mxu0 0
  %46 = vmatprep.subr.bf16.mxu0 0
  %47 = vmatpush1.bf16.msra.mxu0 0
  %48 = vmatprep.subr.bf16.mxu0 0
  %49 = vmatpush1.bf16.msra.mxu0 0
  %50 = vmatprep.subr.bf16.mxu0 0
  %51 = vmatpush1.bf16.msra.mxu0 0
  %52 = vmatprep.subr.bf16.mxu0 0
  %53 = vmatpush1.bf16.msra.mxu0 0
  %54 = vmatprep.subr.bf16.mxu0 0
  %55 = vmatpush1.bf16.msra.mxu0 0
  %56 = vmatprep.subr.bf16.mxu0 0
  %57 = vmatpush1.bf16.msra.mxu0 0
  %58 = vmatprep.subr.bf16.mxu0 0
  %59 = vmatpush1.bf16.msra.mxu0 0
  %60 = vmatprep.subr.bf16.mxu0 0
  %61 = vmatpush1.bf16.msra.mxu0 0
  %62 = vmatprep.subr.bf16.mxu0 0
  %63 = vmatpush1.bf16.msra.mxu0 0
  %64 = vmatprep.subr.bf16.mxu0 0
  %65 = vmatpush1.bf16.msra.mxu0 0
  %66 = vmatprep.subr.bf16.mxu0 0
  %67 = vmatpush1.bf16.msra.mxu0 0
  %68 = vmatprep.subr.bf16.mxu0 0
  %69 = vmatpush1.bf16.msra.mxu0 0
  %70 = vmatprep.subr.bf16.mxu0 0
  %71 = vmatpush1.bf16.msra.mxu0 0
  %72 = vmatprep.subr.bf16.mxu0 0
  %73 = vmatpush1.bf16.msra.mxu0 0
  %74 = vmatprep.mubr.bf16.mxu0 0
  %75 = vmatmul.mubr.bf16.gmra.mrb[0].mxu0 %v36
  %v76 = vpop.f32.mrb[0].mxu0
  %v77 = vadd.f32 0.0, %v76
  %v78 = vpop.f32.mrb[0].mxu0
  %v79 = vpop.f32.mrb[0].mxu0
  %v80 = vadd.f32 0.0, %v79
  %v81 = vpop.f32.mrb[0].mxu0
  %82 = vdwg.mxu0
  %v83 = vpack.c.bf16 %v80, %v77
  %v84 = vld [vmem:[%s5] sm:$0x1]
  %v86 = vpack.i.b16 %v84, %v84
  %v88 = vlaneseq
  %v89 = vshrl.u32 %v88, 7
  %v90 = vsub.s32 0, %v89
  %v91 = vrot.slane %v86, %v90
  %v92 = vadd.bf16 %v83, %v91
  %v93 = vtanh.bf16.pop %v92
  %v94 = vld [vmem:[%s2] sm:$0xf]
  %v95 = vld [vmem:[%s2 + $0x4] sm:$0xf]
  %v96 = vld [vmem:[%s2 + $0x8] sm:$0xf]
  %v97 = vld [vmem:[%s2 + $0xc] sm:$0xf]
  %v98 = vld [vmem:[%s2 + $0x10] sm:$0xf]
  %v99 = vld [vmem:[%s2 + $0x14] sm:$0xf]
  %v100 = vld [vmem:[%s2 + $0x18] sm:$0xf]
  %v101 = vld [vmem:[%s2 + $0x1c] sm:$0xf]
  %v110 = vunpack.c.l.b16 %v94
  %v111 = vunpack.c.l.b16 %v95
  %v112 = vunpack.c.l.b16 %v96
  %v113 = vunpack.c.l.b16 %v97
  %v114 = vunpack.c.l.b16 %v98
  %v115 = vunpack.c.l.b16 %v99
  %v116 = vunpack.c.l.b16 %v100
  %v117 = vunpack.c.l.b16 %v101
  %v118 = vpack.c.b16 %v111, %v110
  %v119 = vpack.c.b16 %v113, %v112
  %v120 = vpack.c.b16 %v115, %v114
  %v121 = vpack.c.b16 %v117, %v116
  %vm126 = vcmask 523264
  %v128 = vsel %vm126, %v93, 0
  %130 = vmatprep.subr.bf16.mxu0 0
  %131 = vmatpush1.bf16.msra.mxu0 %v118
  %132 = vmatprep.subr.bf16.mxu0 0
  %133 = vmatpush1.bf16.msra.mxu0 %v119
  %134 = vmatprep.subr.bf16.mxu0 0
  %135 = vmatpush1.bf16.msra.mxu0 %v120
  %136 = vmatprep.subr.bf16.mxu0 0
  %137 = vmatpush1.bf16.msra.mxu0 %v121
  %138 = vmatprep.subr.bf16.mxu0 0
  %139 = vmatpush1.bf16.msra.mxu0 0
  %140 = vmatprep.subr.bf16.mxu0 0
  %141 = vmatpush1.bf16.msra.mxu0 0
  %142 = vmatprep.subr.bf16.mxu0 0
  %143 = vmatpush1.bf16.msra.mxu0 0
  %144 = vmatprep.subr.bf16.mxu0 0
  %145 = vmatpush1.bf16.msra.mxu0 0
  %146 = vmatprep.subr.bf16.mxu0 0
  %147 = vmatpush1.bf16.msra.mxu0 0
  %148 = vmatprep.subr.bf16.mxu0 0
  %149 = vmatpush1.bf16.msra.mxu0 0
  %150 = vmatprep.subr.bf16.mxu0 0
  %151 = vmatpush1.bf16.msra.mxu0 0
  %152 = vmatprep.subr.bf16.mxu0 0
  %153 = vmatpush1.bf16.msra.mxu0 0
  %154 = vmatprep.subr.bf16.mxu0 0
  %155 = vmatpush1.bf16.msra.mxu0 0
  %156 = vmatprep.subr.bf16.mxu0 0
  %157 = vmatpush1.bf16.msra.mxu0 0
  %158 = vmatprep.subr.bf16.mxu0 0
  %159 = vmatpush1.bf16.msra.mxu0 0
  %160 = vmatprep.subr.bf16.mxu0 0
  %161 = vmatpush1.bf16.msra.mxu0 0
  %162 = vmatprep.mubr.bf16.mxu0 0
  %163 = vmatmul.mubr.bf16.gmra.mrb[0].mxu0 %v128
  %v164 = vpop.f32.mrb[0].mxu0
  %v165 = vadd.f32 0.0, %v164
  %v166 = vpop.f32.mrb[0].mxu0
  %v167 = vpop.f32.mrb[0].mxu0
  %v168 = vadd.f32 0.0, %v167
  %v169 = vpop.f32.mrb[0].mxu0
  %170 = vdwg.mxu0
  %v171 = vpack.c.bf16 %v168, %v165
  %v172 = vld [vmem:[%s6] sm:$0x1]
  %v174 = vpack.i.b16 %v172, %v172
  %v176 = vlaneseq
  %v177 = vshrl.u32 %v176, 7
  %v178 = vsub.s32 0, %v177
  %v179 = vrot.slane %v174, %v178
  %v180 = vadd.bf16 %v171, %v179
  %v181 = vtanh.bf16.pop %v180
  %v182 = vld [vmem:[%s3] sm:$0x3f]
  %v183 = vld [vmem:[%s4] sm:$0xf]
  %v184 = vld [vmem:[%s4 + $0x4] sm:$0xf]
  %v185 = vld [vmem:[%s4 + $0x8] sm:$0xf]
  %v186 = vld [vmem:[%s4 + $0xc] sm:$0xf]
  %v187 = vld [vmem:[%s4 + $0x10] sm:$0xf]
  %v188 = vld [vmem:[%s4 + $0x14] sm:$0xf]
  %v189 = vld [vmem:[%s4 + $0x18] sm:$0xf]
  %v190 = vld [vmem:[%s4 + $0x1c] sm:$0xf]
  %v199 = vunpack.c.l.b16 %v183
  %v200 = vunpack.c.l.b16 %v184
  %v201 = vunpack.c.l.b16 %v185
  %v202 = vunpack.c.l.b16 %v186
  %v203 = vunpack.c.l.b16 %v187
  %v204 = vunpack.c.l.b16 %v188
  %v205 = vunpack.c.l.b16 %v189
  %v206 = vunpack.c.l.b16 %v190
  %v207 = vpack.c.b16 %v200, %v199
  %v208 = vpack.c.b16 %v202, %v201
  %v209 = vpack.c.b16 %v204, %v203
  %v210 = vpack.c.b16 %v206, %v205
  %v216 = vsel %vm126, %v181, 0
  %218 = vmatprep.subr.bf16.mxu0 0
  %219 = vmatpush1.bf16.msra.mxu0 %v207
  %220 = vmatprep.subr.bf16.mxu0 0
  %221 = vmatpush1.bf16.msra.mxu0 %v208
  %222 = vmatprep.subr.bf16.mxu0 0
  %223 = vmatpush1.bf16.msra.mxu0 %v209
  %224 = vmatprep.subr.bf16.mxu0 0
  %225 = vmatpush1.bf16.msra.mxu0 %v210
  %226 = vmatprep.subr.bf16.mxu0 0
  %227 = vmatpush1.bf16.msra.mxu0 0
  %228 = vmatprep.subr.bf16.mxu0 0
  %229 = vmatpush1.bf16.msra.mxu0 0
  %230 = vmatprep.subr.bf16.mxu0 0
  %231 = vmatpush1.bf16.msra.mxu0 0
  %232 = vmatprep.subr.bf16.mxu0 0
  %233 = vmatpush1.bf16.msra.mxu0 0
  %234 = vmatprep.subr.bf16.mxu0 0
  %235 = vmatpush1.bf16.msra.mxu0 0
  %236 = vmatprep.subr.bf16.mxu0 0
  %237 = vmatpush1.bf16.msra.mxu0 0
  %238 = vmatprep.subr.bf16.mxu0 0
  %239 = vmatpush1.bf16.msra.mxu0 0
  %240 = vmatprep.subr.bf16.mxu0 0
  %241 = vmatpush1.bf16.msra.mxu0 0
  %242 = vmatprep.subr.bf16.mxu0 0
  %243 = vmatpush1.bf16.msra.mxu0 0
  %244 = vmatprep.subr.bf16.mxu0 0
  %245 = vmatpush1.bf16.msra.mxu0 0
  %246 = vmatprep.subr.bf16.mxu0 0
  %247 = vmatpush1.bf16.msra.mxu0 0
  %248 = vmatprep.subr.bf16.mxu0 0
  %249 = vmatpush1.bf16.msra.mxu0 0
  %250 = vmatprep.mubr.bf16.mxu0 0
  %251 = vmatmul.mubr.bf16.gmra.mrb[0].mxu0 %v216
  %v252 = vpop.f32.mrb[0].mxu0
  %v253 = vadd.f32 0.0, %v252
  %v254 = vpop.f32.mrb[0].mxu0
  %v255 = vpop.f32.mrb[0].mxu0
  %v256 = vadd.f32 0.0, %v255
  %v257 = vpop.f32.mrb[0].mxu0
  %258 = vdwg.mxu0
  %v260 = vsel %vm34, %v30, 0
  %v263 = vsel %vm34, %v31, 0
  %vm265 = vcmask 1045504
  %v267 = vsel %vm265, %v182, 0
  %269 = vmatprep.subr.mxu0 0.0
  %270 = vmatpush1.msra.mxu0 %v267
  %271 = vmatprep.subr.mxu0 0.0
  %272 = vmatpush1.msra.mxu0 0.0
  %273 = vmatprep.subr.mxu0 0.0
  %274 = vmatpush1.msra.mxu0 0.0
  %275 = vmatprep.subr.mxu0 0.0
  %276 = vmatpush1.msra.mxu0 0.0
  %277 = vmatprep.subr.mxu0 0.0
  %278 = vmatpush1.msra.mxu0 0.0
  %279 = vmatprep.subr.mxu0 0.0
  %280 = vmatpush1.msra.mxu0 0.0
  %281 = vmatprep.subr.mxu0 0.0
  %282 = vmatpush1.msra.mxu0 0.0
  %283 = vmatprep.subr.mxu0 0.0
  %284 = vmatpush1.msra.mxu0 0.0
  %285 = vmatprep.subr.mxu0 0.0
  %286 = vmatpush1.msra.mxu0 0.0
  %287 = vmatprep.subr.mxu0 0.0
  %288 = vmatpush1.msra.mxu0 0.0
  %289 = vmatprep.subr.mxu0 0.0
  %290 = vmatpush1.msra.mxu0 0.0
  %291 = vmatprep.subr.mxu0 0.0
  %292 = vmatpush1.msra.mxu0 0.0
  %293 = vmatprep.subr.mxu0 0.0
  %294 = vmatpush1.msra.mxu0 0.0
  %295 = vmatprep.subr.mxu0 0.0
  %296 = vmatpush1.msra.mxu0 0.0
  %297 = vmatprep.subr.mxu0 0.0
  %298 = vmatpush1.msra.mxu0 0.0
  %299 = vmatprep.subr.mxu0 0.0
  %300 = vmatpush1.msra.mxu0 0.0
  %301 = vmatprep.subr.mxu0 0.0
  %302 = vmatpush1.msra.mxu0 0.0
  %303 = vmatprep.subr.mxu0 0.0
  %304 = vmatpush1.msra.mxu0 0.0
  %305 = vmatprep.subr.mxu0 0.0
  %306 = vmatpush1.msra.mxu0 0.0
  %307 = vmatprep.subr.mxu0 0.0
  %308 = vmatpush1.msra.mxu0 0.0
  %309 = vmatprep.subr.mxu0 0.0
  %310 = vmatpush1.msra.mxu0 0.0
  %311 = vmatprep.subr.mxu0 0.0
  %312 = vmatpush1.msra.mxu0 0.0
  %313 = vmatprep.subr.mxu0 0.0
  %314 = vmatpush1.msra.mxu0 0.0
  %315 = vmatprep.subr.mxu0 0.0
  %316 = vmatpush1.msra.mxu0 0.0
  %317 = vmatprep.subr.mxu0 0.0
  %318 = vmatpush1.msra.mxu0 0.0
  %319 = vmatprep.subr.mxu0 0.0
  %320 = vmatpush1.msra.mxu0 0.0
  %321 = vmatprep.subr.mxu0 0.0
  %322 = vmatpush1.msra.mxu0 0.0
  %323 = vmatprep.subr.mxu0 0.0
  %324 = vmatpush1.msra.mxu0 0.0
  %325 = vmatprep.subr.mxu0 0.0
  %326 = vmatpush1.msra.mxu0 0.0
  %327 = vmatprep.subr.mxu0 0.0
  %328 = vmatpush1.msra.mxu0 0.0
  %329 = vmatprep.subr.mxu0 0.0
  %330 = vmatpush1.msra.mxu0 0.0
  %331 = vmatprep.subr.mxu0 0.0
  %332 = vmatpush1.msra.mxu0 0.0
  %333 = vmatprep.mubr.f32.mxu0 0.0
  %334 = vmatmul.mubr.f32.gmra.mrb[0].mxu0 %v260
  %v335 = vpop.f32.mrb[0].mxu0
  %v336 = vadd.f32 %v253, %v335
  %v337 = vpop.f32.mrb[0].mxu0
  %338 = vmatprep.mubr.f32.mxu0 0.0
  %339 = vmatmul.mubr.f32.gmra.mrb[0].mxu0 %v263
  %v340 = vpop.f32.mrb[0].mxu0
  %v341 = vadd.f32 %v256, %v340
  %v342 = vpop.f32.mrb[0].mxu0
  %343 = vdwg.mxu0
  %v344 = vld [vmem:[%s7] sm:$0x1]
  %v346 = vlaneseq
  %v347 = vshrl.u32 %v346, 7
  %v348 = vsub.s32 0, %v347
  %v349 = vrot.slane %v344, %v348
  %v351 = vadd.f32 %v336, %v349
  %v352 = vadd.f32 %v341, %v349
  %vm353 = vcmask 39936
  %354 = vst.msk [vmem:[%s8] sm:$0xff] %vm353, %v351
  %355 = vst.msk [vmem:[%s8 + $0x8] sm:$0xff] %vm353, %v352
  // Predicated region
  $region34: #{identity_init_simple_res_net_fwd.1} parent=0 // pred_check
    _
  $region35: #{identity_init_simple_res_net_fwd.1} parent=0 // pred_check_branch
    %357 = sbr.rel (0) target = $region37
  $region36: #{identity_init_simple_res_net_fwd.1} parent=0 // pred_region
    _
  $region37: #{identity_init_simple_res_net_fwd.1} parent=0 // pred_fallthru
    _
  // Predicated region
  $region38: #{identity_init_simple_res_net_fwd.1} parent=0 // pred_check
    _
  $region39: #{identity_init_simple_res_net_fwd.1} parent=0 // pred_check_branch
    %359 = sbr.rel (0) target = $region41
  $region40: #{identity_init_simple_res_net_fwd.1} parent=0 // pred_region
    _
  $region41: #{identity_init_simple_res_net_fwd.1} parent=0 // pred_fallthru
    _

</llo_original>
